<compile_context>
chip_gen: v6e
topology: v6e:2x2x1
jax: 0.10.0
libtpu: 0.0.40
codegen_flags: <defaults>
</compile_context>

<pallas_src>
import functools

import jax
import jax.numpy as jnp
from jax import lax
from jax.experimental import pallas as pl
from jax.experimental.pallas import tpu as pltpu


def _round_up(x, m):
    return ((x + m - 1) // m) * m


def _vmem_capacity_bytes():
    try:
        cap = getattr(pltpu.get_tpu_info(), "vmem_capacity_bytes", None)
        if cap:
            return int(cap)
    except Exception:
        pass
    return 64 * 1024 * 1024  # conservative (v7x per-TC); safe on every generation


# ----------------------------------------------------------------------------
# Stage 1: global average pool, streamed over (row-block, spatial-block).
# ----------------------------------------------------------------------------
def _accumulate(x_ref, acc_ref, *, masked, group, n_groups, total_s, tail_start):
    """Sum the 128-lane groups of the current (br, bs) block into the lane-dense
    (br, group) f32 accumulator with plain VPU adds (no per-step XLU reduce)."""
    psum = None
    for g in range(n_groups):
        lo = g * group
        if masked:
            valid = total_s - tail_start - lo     # static Python int
            if valid <= 0:                        # group entirely past H*W: skip
                continue
        xs = x_ref[...] if n_groups == 1 else x_ref[:, lo:lo + group]
        xs = xs.astype(jnp.float32)
        if masked and valid < group:              # only partially-valid group
            lane = lax.broadcasted_iota(jnp.int32, xs.shape, 1)
            xs = jnp.where(lane < valid, xs, 0.0)
        psum = xs if psum is None else psum + xs
    if psum is not None:
        acc_ref[...] += psum


def _pool_kernel(x_ref, o_ref, acc_ref, *, inv_total, total_s, tail_start, ragged):
    s = pl.program_id(1)
    last = pl.num_programs(1) - 1
    bs = x_ref.shape[1]
    group = 128 if bs >= 128 else bs
    n_groups = max(1, bs // group)

    @pl.when(s == 0)
    def _init():
        acc_ref[...] = jnp.zeros_like(acc_ref)

    kwargs = dict(group=group, n_groups=n_groups,
                  total_s=total_s, tail_start=tail_start)
    if ragged:
        # Only the final spatial block pays for the mask.
        @pl.when(s < last)
        def _body():
            _accumulate(x_ref, acc_ref, masked=False, **kwargs)

        @pl.when(s == last)
        def _tail():
            _accumulate(x_ref, acc_ref, masked=True, **kwargs)
    else:
        _accumulate(x_ref, acc_ref, masked=False, **kwargs)

    @pl.when(s == last)
    def _finalize():
        # Single cross-lane reduce + scale + masked width-1 store, epilogue only.
        o_ref[...] = (jnp.sum(acc_ref[...], axis=-1, keepdims=True)
                      * inv_total).astype(o_ref.dtype)


def _choose_blocks(rows, cols, itemsize, target_bytes):
    sublane = max(8, 32 // itemsize)  # 8 for f32, 16 for bf16
    # Spatial (lane) block: full width below 128, else a multiple of 128 capped
    # at 4096 lanes (long contiguous DMA bursts; ragged tail masked in-kernel).
    if cols < 128:
        bs = cols
    elif cols % 128 == 0:
        bs = min(cols, 4096)
    else:
        bs = min(128 * (cols // 128), 4096)
    # Row block: fill the tile-size target, but keep >= 2 row blocks when
    # possible so v7x's second TensorCore (parallel axis) gets work.
    if rows <= sublane:
        br = rows
    else:
        br = max(sublane, target_bytes // max(1, bs * itemsize))
        br = _round_up(br, sublane)
        if rows >= 2 * sublane:
            br = min(br, _round_up(pl.cdiv(rows, 2), sublane))
        br = min(br, _round_up(rows, sublane))
    return br, bs


def _global_avg_pool(x_flat, *, inv_total, block_rows=None, block_spatial=None):
    rows, cols = x_flat.shape
    itemsize = jnp.dtype(x_flat.dtype).itemsize
    sublane = max(8, 32 // itemsize)

    vmem_cap = _vmem_capacity_bytes()
    # Generation-aware tile target: ~16 MiB on 128-MiB-VMEM chips (v5e/v6e),
    # ~8 MiB on v7x (64 MiB per TC); never below 2 MiB.
    target_bytes = min(16 << 20, max(2 << 20, vmem_cap // 8))

    auto_br, auto_bs = _choose_blocks(rows, cols, itemsize, target_bytes)
    br = block_rows or auto_br
    bs = block_spatial or auto_bs
    if not (bs == cols or bs % 128 == 0):
        raise ValueError(
            f"block_spatial={bs} must equal H*W ({cols}) or be a multiple of 128")
    if not (br == rows or br % sublane == 0):
        raise ValueError(
            f"block_rows={br} must equal B*C ({rows}) or be a multiple of {sublane}")

    grid = (pl.cdiv(rows, br), pl.cdiv(cols, bs))
    ragged = (cols % bs) != 0
    tail_start = (grid[1] - 1) * bs
    acc_lanes = 128 if bs >= 128 else bs

    # 2x double-buffered input tiles + f32 accumulator + output, with headroom.
    needed = 2 * br * bs * itemsize + br * acc_lanes * 4 + 2 * br * 4
    vmem_limit = int(min(vmem_cap, max(32 << 20, needed + (8 << 20))))

    kernel = functools.partial(
        _pool_kernel, inv_total=float(inv_total), total_s=cols,
        tail_start=tail_start, ragged=ragged)
    cost = pl.CostEstimate(
        flops=rows * cols,
        transcendentals=0,
        bytes_accessed=rows * cols * itemsize + rows * 4,
    )
    return pl.pallas_call(
        kernel,
        out_shape=jax.ShapeDtypeStruct((rows, 1), jnp.float32),
        grid=grid,
        in_specs=[pl.BlockSpec((br, bs), lambda i, s: (i, s))],
        out_specs=pl.BlockSpec((br, 1), lambda i, s: (i, 0)),
        scratch_shapes=[pltpu.VMEM((br, acc_lanes), jnp.float32)],
        compiler_params=pltpu.CompilerParams(
            dimension_semantics=("parallel", "arbitrary"),
            vmem_limit_bytes=vmem_limit),
        cost_estimate=cost,
    )(x_flat)


# ----------------------------------------------------------------------------
# Stage 2: tiny MLP head (Linear -> GELU -> Linear) on the pooled vector.
# ----------------------------------------------------------------------------
def _mlp_kernel(p_ref, wd_ref, bd_ref, wu_ref, bu_ref, o_ref):
    wd = wd_ref[...]
    wu = wu_ref[...]
    pooled = p_ref[...]                                  # (B, C) float32
    if wd.dtype != jnp.float32:                          # bf16 weights: native MXU path
        pooled = pooled.astype(wd.dtype)
    # nn.Linear weight is (out, in) -> contract dim 1 of both operands.
    h = lax.dot_general(pooled, wd, (((1,), (1,)), ((), ())),
                        preferred_element_type=jnp.float32)
    h = h + bd_ref[...].astype(jnp.float32)
    h = jax.nn.gelu(h, approximate=False)                # exact (erf) GELU, as nn.GELU
    if wu.dtype != jnp.float32:
        h = h.astype(wu.dtype)
    y = lax.dot_general(h, wu, (((1,), (1,)), ((), ())),
                        preferred_element_type=jnp.float32)
    y = y + bu_ref[...].astype(jnp.float32)
    o_ref[...] = y.astype(o_ref.dtype)


def _mlp(pooled, w_down, b_down, w_up, b_up, out_dtype):
    b, c = pooled.shape
    hidden = w_down.shape[0]
    cost = pl.CostEstimate(
        flops=4 * b * c * hidden,
        transcendentals=b * hidden,
        bytes_accessed=int(pooled.size * 4
                           + w_down.size * w_down.dtype.itemsize
                           + w_up.size * w_up.dtype.itemsize
                           + b_down.size * b_down.dtype.itemsize
                           + b_up.size * b_up.dtype.itemsize
                           + b * c * jnp.dtype(out_dtype).itemsize),
    )
    vmem = pl.BlockSpec(memory_space=pltpu.MemorySpace.VMEM)
    return pl.pallas_call(
        _mlp_kernel,
        out_shape=jax.ShapeDtypeStruct((b, c), out_dtype),
        in_specs=[vmem] * 5,
        out_specs=vmem,
        cost_estimate=cost,
    )(pooled, w_down, b_down.reshape(1, hidden), w_up, b_up.reshape(1, c))


# ----------------------------------------------------------------------------
# Public wrapper: Feature_Pool.forward
# ----------------------------------------------------------------------------
def _choose_split(rows, cols, sublane):
    """Split each (row, H*W) into k sub-rows of H*W/k so tiny B*C still gets full
    sublane occupancy and >= 2 row blocks (v7x dual-TC sharding)."""
    k = 1
    target_rows = 2 * sublane
    while (rows * k < target_rows and cols % (2 * k) == 0
           and cols // (2 * k) >= 128):
        k *= 2
    return k


def feature_pool(x, w_down, b_down, w_up, b_up, *,
                 block_rows=None, block_spatial=None, spatial_split=None):
    """x: (B, C, H, W) NCHW.  Returns (B, C), matching Feature_Pool.forward."""
    b, c, h, w = x.shape
    rows, cols = b * c, h * w
    itemsize = jnp.dtype(x.dtype).itemsize
    sublane = max(8, 32 // itemsize)

    k = spatial_split if spatial_split is not None else _choose_split(rows, cols, sublane)
    # Row-major reshape: row r splits into rows r*k .. r*k+k-1 (disjoint spatial chunks).
    x_flat = x.reshape(rows * k, cols // k)
    pooled = _global_avg_pool(x_flat, inv_total=1.0 / cols,
                              block_rows=block_rows, block_spatial=block_spatial)
    if k > 1:
        pooled = pooled.reshape(rows, k).sum(axis=-1)   # combine sub-row partial means
    pooled = pooled.reshape(b, c)                        # tiny glue reshape in plain JAX
    return _mlp(pooled, w_down, b_down, w_up, b_up, x.dtype)


def reference(x, w_down, b_down, w_up, b_up):
    pooled = jnp.mean(x.astype(jnp.float32), axis=(2, 3))       # (B, C)
    h = pooled @ w_down.T.astype(jnp.float32) + b_down.astype(jnp.float32)
    h = jax.nn.gelu(h, approximate=False)
    return (h @ w_up.T.astype(jnp.float32) + b_up.astype(jnp.float32)).astype(x.dtype)


if __name__ == "__main__":
    key = jax.random.PRNGKey(0)
    k_x, k_wd, k_bd, k_wu, k_bu, k_x2, k_x3 = jax.random.split(key, 7)

    def make_params(dim, ratio, kd, kbd, ku, kbu):
        hidden = dim * ratio
        bound_d = 1.0 / (dim ** 0.5)
        w_down = jax.random.uniform(kd, (hidden, dim), minval=-bound_d, maxval=bound_d)
        b_down = jax.random.uniform(kbd, (hidden,), minval=-bound_d, maxval=bound_d)
        bound_u = 1.0 / (hidden ** 0.5)
        w_up = jax.random.uniform(ku, (dim, hidden), minval=-bound_u, maxval=bound_u)
        b_up = jax.random.uniform(kbu, (dim,), minval=-bound_u, maxval=bound_u)
        return w_down, b_down, w_up, b_up

    # --- Case 1: base shape (2, 4, 16, 16) f32, auto config ------------------
    B, C, H, W = 2, 4, 16, 16
    params4 = make_params(C, 2, k_wd, k_bd, k_wu, k_bu)
    x = jax.random.normal(k_x, (B, C, H, W), dtype=jnp.float32)
    y_ref = reference(x, *params4)

    y1 = feature_pool(x, *params4)              # auto: sub-row split + 2 row blocks
    jax.block_until_ready(y1)
    assert y1.shape == (B, C)
    assert jnp.allclose(y1, y_ref, atol=1e-5, rtol=1e-5), "mismatch (auto)"

    # --- Case 2: same shape, forced multi-step spatial accumulation ----------
    y2 = feature_pool(x, *params4, spatial_split=1, block_spatial=128)
    jax.block_until_ready(y2)
    assert jnp.allclose(y2, y_ref, atol=1e-5, rtol=1e-5), "mismatch (multi-step)"

    # --- Case 3: ragged spatial tail (H*W = 225), C = 16 ----------------------
    B3, C3, H3, W3 = 2, 16, 15, 15
    params16 = make_params(C3, 2, k_bd, k_wu, k_bu, k_wd)
    x3 = jax.random.normal(k_x3, (B3, C3, H3, W3), dtype=jnp.float32)
    y3 = feature_pool(x3, *params16)
    jax.block_until_ready(y3)
    y3_ref = reference(x3, *params16)
    assert jnp.allclose(y3, y3_ref, atol=1e-5, rtol=1e-5), "mismatch (ragged tail)"

    # --- Case 4: bf16 input ----------------------------------------------------
    x4 = jax.random.normal(k_x2, (B3, C3, 16, 16), dtype=jnp.bfloat16)
    y4 = feature_pool(x4, *params16)
    jax.block_until_ready(y4)
    y4_ref = reference(x4, *params16)
    assert jnp.allclose(y4.astype(jnp.float32), y4_ref.astype(jnp.float32),
                        atol=1e-2, rtol=1e-2), "mismatch (bf16)"

    print("KERNEL_OK")
</pallas_src>

<mosaic_0001>
module attributes {stable_mosaic.version = 11 : i64} {
  func.func @_pool_kernel(%arg0: i32, %arg1: i32, %arg2: memref<8x128xf32, #tpu.memory_space<vmem>>, %arg3: memref<8x1xf32, #tpu.memory_space<vmem>>, %arg4: memref<8x128xf32, #tpu.memory_space<vmem>>) attributes {dimension_semantics = [#tpu.dimension_semantics<parallel>, #tpu.dimension_semantics<arbitrary>], iteration_bounds = array<i64: 2, 1>, scalar_prefetch = 0 : i64, scratch_operands = 1 : i64, tpu.core_type = #tpu.core_type<tc>, window_params = [{transform_indices = @transform_0, window_bounds = array<i64: 8, 128>}, {transform_indices = @transform_1, window_bounds = array<i64: 8, 1>}]} {
    %c0_i32 = arith.constant 0 : i32
    %0 = arith.cmpi eq, %arg1, %c0_i32 : i32
    %1 = arith.extui %0 : i1 to i32
    %c0_i32_0 = arith.constant 0 : i32
    %2 = arith.cmpi ne, %1, %c0_i32_0 : i32
    scf.if %2 {
      %cst = arith.constant 0.000000e+00 : f32
      %10 = vector.broadcast %cst : f32 to vector<8x128xf32>
      %c0_8 = arith.constant 0 : index
      %c0_9 = arith.constant 0 : index
      %11 = vector.load %arg4[%c0_8, %c0_9] : memref<8x128xf32, #tpu.memory_space<vmem>>, vector<8x128xf32>
      tpu.vector_store %arg4[%c0_8, %c0_9], %10 {strides = array<i32>} : memref<8x128xf32, #tpu.memory_space<vmem>>, vector<8x128xf32>,
    } else {
    }
    %c0 = arith.constant 0 : index
    %c0_1 = arith.constant 0 : index
    %3 = vector.load %arg2[%c0, %c0_1] : memref<8x128xf32, #tpu.memory_space<vmem>>, vector<8x128xf32>
    %c0_2 = arith.constant 0 : index
    %c0_3 = arith.constant 0 : index
    %4 = vector.load %arg4[%c0_2, %c0_3] : memref<8x128xf32, #tpu.memory_space<vmem>>, vector<8x128xf32>
    %5 = arith.addf %4, %3 : vector<8x128xf32>
    %c0_4 = arith.constant 0 : index
    %c0_5 = arith.constant 0 : index
    %6 = vector.load %arg4[%c0_4, %c0_5] : memref<8x128xf32, #tpu.memory_space<vmem>>, vector<8x128xf32>
    tpu.vector_store %arg4[%c0_4, %c0_5], %5 {strides = array<i32>} : memref<8x128xf32, #tpu.memory_space<vmem>>, vector<8x128xf32>,
    %c0_i32_6 = arith.constant 0 : i32
    %7 = arith.cmpi eq, %arg1, %c0_i32_6 : i32
    %8 = arith.extui %7 : i1 to i32
    %c0_i32_7 = arith.constant 0 : i32
    %9 = arith.cmpi ne, %8, %c0_i32_7 : i32
    scf.if %9 {
      %c0_8 = arith.constant 0 : index
      %c0_9 = arith.constant 0 : index
      %10 = vector.load %arg4[%c0_8, %c0_9] : memref<8x128xf32, #tpu.memory_space<vmem>>, vector<8x128xf32>
      %cst = arith.constant dense<0.000000e+00> : vector<8xf32>
      %11 = vector.multi_reduction <add>, %10, %cst [1] : vector<8x128xf32> to vector<8xf32>
      %12 = vector.shape_cast %11 : vector<8xf32> to vector<8x1xf32>
      %cst_10 = arith.constant 3.906250e-03 : f32
      %13 = vector.broadcast %cst_10 : f32 to vector<8x1xf32>
      %14 = arith.mulf %12, %13 : vector<8x1xf32>
      %c0_11 = arith.constant 0 : index
      %c0_12 = arith.constant 0 : index
      %15 = vector.load %arg3[%c0_11, %c0_12] : memref<8x1xf32, #tpu.memory_space<vmem>>, vector<8x1xf32>
      tpu.vector_store %arg3[%c0_11, %c0_12], %14 {strides = array<i32>} : memref<8x1xf32, #tpu.memory_space<vmem>>, vector<8x1xf32>,
    } else {
    }
    return
  }
  func.func @transform_0(%arg0: i32, %arg1: i32) -> (i32, i32) {
    %c0_i32 = arith.constant 0 : i32
    return %arg0, %arg1 : i32, i32
  }
  func.func @transform_1(%arg0: i32, %arg1: i32) -> (i32, i32) {
    %c0_i32 = arith.constant 0 : i32
    %c0_i32_0 = arith.constant 0 : i32
    return %arg0, %c0_i32 : i32, i32
  }
}

</mosaic_0001>

<llo_original>
// kernel: tpu_custom_call.1
$region0: #{tpu_custom_call.1}
  #allocation0 [shape = 'u32[]', space=smem, size = 0x4, offset = 0x4, fixed_abs, tag = 'smem constant byte address 0x4 - core index']
  #allocation1 [shape = 'u32[144,128]{1,0:T(1,128)}', space=vmem, size = 0x12000, scoped, tag = 'internal scratch']
  #allocation2 [shape = 'f32[8,128]{1,0:T(8,128)}', space=vmem, size = 0x1000, scoped, tag = 'scratch operand']
  %s0 = inlined_call_operand.hbm [shape: f32[16,128], index: 0, kind: input, shape index: {}]
  %s1 = inlined_call_operand.vmem [shape: f32[16,1], index: 1, kind: output, shape index: {}]
  %s2 = sld [smem:[#allocation0]]
  $region49: #{tpu_custom_call.1} parent=0
    _
  %s4 = ssub.s32 1, %s2
  %s5 = scalar_select 0, %s4, %s2
  $region1: #{tpu_custom_call.1} parent=0
    #allocation3 [shape = 'u8[8192]{0}', space=vmem, size = 0x2000, scoped, tag = 'input window, operand 0']
    #allocation4 [shape = 's32[2]{0}', space=sflag, size = 0x8, scoped, tag = 'scoped memory for tpu_custom_call.1']
    %6 = vsyncpa [#allocation4], 0
    %s7 = scalar_lea.sflag [#allocation4], 1
    %8 = vsyncpa %s7, 0
    loop: start=0, step=1, limit=4
    $region2: #{tpu_custom_call.1} parent=1 // loop_pre_header
      _
    $region3: #{tpu_custom_call.1} parent=1 // loop_header
      %s10 = sphi 0, %s14
      %p11 = scmp.ge.s32.totalorder %s10, 4
      %s17 = sphi 0, %s29
      %s18 = sphi 0, %s25
      %s19 = sphi 0, %s17
      %s20 = sphi 0, %s18
      %s21 = sphi 0, %s19
      %s22 = sphi 0, %s20
      %s34 = sphi 0, %s36
      %s37 = sphi 0, %s34
      %s38 = sphi 0, %s37
      %s54 = sphi 0, %s38
      %s60 = sphi 0, %s62
      %s63 = sphi 0, %s60
      %s64 = sphi 0, %s63
      %s80 = sphi 0, %s64
    $region4: #{tpu_custom_call.1} parent=1 // loop_header_branch
      %13 = sbr.rel (%p11) target = $region8
    $region5: #{tpu_custom_call.1} parent=1 // loop_body
      %s15 = ssub.s32 %s10, 1
      %s16 = ssub.s32 %s10, 2
      %s23 = sadd.s32 1, %s18
      %p24 = scmp.ge.s32.totalorder %s23, 1
      %s25 = scalar_select %p24, 0, %s23
      %s26 = sadd.s32 1, %s17
      %s27 = scalar_select %p24, %s26, %s17
      %p28 = scmp.ge.s32.totalorder %s27, 2
      %s29 = scalar_select %p28, 0, %s27
      %s30 = ssub.s32 %s17, %s29
      %s31 = ssub.s32 %s18, %s25
      %s32 = sor.u32 %s30, %s31
      %p33 = scmp.eq.s32.totalorder %s32, 0
      %s35 = sadd.s32 %s34, 1
      %s36 = scalar_select %p33, %s34, %s35
      %p39 = pneg %p33
      %p40 = scmp.eq.s32.totalorder %s10, 1
      %p41 = por %p39, %p40
      %p42 = scmp.ne.s32.totalorder %s34, %s37
      %p43 = scmp.eq.s32.totalorder %s10, 0
      %p44 = por %p42, %p43
      %p45 = scmp.ne.s32.totalorder %s34, %s37
      %p46 = scmp.eq.s32.totalorder %s15, 1
      %p47 = por %p45, %p46
      %p48 = scmp.ne.s32.totalorder %s37, %s38
      %p49 = scmp.eq.s32.totalorder %s15, 0
      %p50 = por %p48, %p49
      %p51 = scmp.ne.s32.totalorder %s37, %s38
      %p52 = scmp.eq.s32.totalorder %s16, 1
      %p53 = por %p51, %p52
      %p55 = scmp.ne.s32.totalorder %s38, %s54
      %p56 = scmp.eq.s32.totalorder %s16, 0
      %p57 = por %p55, %p56
      %s58 = ssub.s32 %s17, %s29
      %p59 = scmp.eq.s32.totalorder %s58, 0
      %s61 = sadd.s32 %s60, 1
      %s62 = scalar_select %p59, %s60, %s61
      %p65 = pneg %p59
      %p66 = scmp.eq.s32.totalorder %s10, 1
      %p67 = por %p65, %p66
      %p68 = scmp.ne.s32.totalorder %s60, %s63
      %p69 = scmp.eq.s32.totalorder %s10, 0
      %p70 = por %p68, %p69
      %p71 = scmp.ne.s32.totalorder %s60, %s63
      %p72 = scmp.eq.s32.totalorder %s15, 1
      %p73 = por %p71, %p72
      %p74 = scmp.ne.s32.totalorder %s63, %s64
      %p75 = scmp.eq.s32.totalorder %s15, 0
      %p76 = por %p74, %p75
      %p77 = scmp.ne.s32.totalorder %s63, %s64
      %p78 = scmp.eq.s32.totalorder %s16, 1
      %p79 = por %p77, %p78
      %p81 = scmp.ne.s32.totalorder %s64, %s80
      %p82 = scmp.eq.s32.totalorder %s16, 0
      %p83 = por %p81, %p82
      %p84 = scmp.le.s32.totalorder 1, %s10
      %p85 = scmp.lt.s32.totalorder %s10, 3
      %p86 = pnand %p84, %p85
      %p87 = pneg %p86
      // Predicated region
      $region9: #{tpu_custom_call.1} parent=5 // pred_check
        _
      $region10: #{tpu_custom_call.1} parent=5 // pred_check_branch
        %89 = sbr.rel (%p86) target = $region12
      $region11: #{tpu_custom_call.1} parent=5 // pred_region
        %s90 = ssub.s32 %s10, 1
      $region12: #{tpu_custom_call.1} parent=5 // pred_fallthru
        _
      %p91 = scmp.lt.s32.totalorder %s10, 2
      // Predicated region
      $region13: #{tpu_custom_call.1} parent=5 // pred_check
        %p92 = pneg %p91
      $region14: #{tpu_custom_call.1} parent=5 // pred_check_branch
        %94 = sbr.rel (%p92) target = $region16
      $region15: #{tpu_custom_call.1} parent=5 // pred_region
        // Predicated region
        $region17: #{tpu_custom_call.1} parent=15 // pred_check
          %p95 = pneg %p44
        $region18: #{tpu_custom_call.1} parent=15 // pred_check_branch
          %97 = sbr.rel (%p95) target = $region20
        $region19: #{tpu_custom_call.1} parent=15 // pred_region
          %s98 = sand.u32 %s34, 1
          %s99 = scalar_lea.sflag [#allocation4], %s98
          %s100 = sand.u32 %s34, 1
          %s101 = smul.addr %s100, 8
          %s102 = scalar_lea.vmem [#allocation3], %s101
          %s104 = ssub.s32 128, 128
          %105 = vsyncadd %s99, %s104
          %s106 = sadd.s32 %s18, %s17
          %s107 = smul.addr %s106, 128
          %s108 = scalar_lea.hbm %s0, %s107
          %s110 = sshll.u32 %s102, 4
          %s111 = int_to_ptr.vmem [resolvable:$true] %s110
          %113 = dma.hbm_to_vmem [thread:$0]  %s108, 128, %s111, %s99
        $region20: #{tpu_custom_call.1} parent=15 // pred_fallthru
          _
      $region16: #{tpu_custom_call.1} parent=5 // pred_fallthru
        _
      %p114 = scmp.le.s32.totalorder 1, %s10
      %p115 = scmp.lt.s32.totalorder %s10, 3
      %p116 = pnand %p114, %p115
      %p117 = pneg %p116
      // Predicated region
      $region21: #{tpu_custom_call.1} parent=5 // pred_check
        _
      $region22: #{tpu_custom_call.1} parent=5 // pred_check_branch
        %119 = sbr.rel (%p116) target = $region24
      $region23: #{tpu_custom_call.1} parent=5 // pred_region
        %s120 = ssub.s32 %s10, 1
        %s121 = sand.u32 %s37, 1
        %s122 = scalar_lea.sflag [#allocation4], %s121
        %s123 = sand.u32 %s37, 1
        %s124 = smul.addr %s123, 8
        %s125 = scalar_lea.vmem [#allocation3], %s124
        // Predicated region
        $region25: #{tpu_custom_call.1} parent=23 // pred_check
          %p126 = pneg %p50
        $region26: #{tpu_custom_call.1} parent=23 // pred_check_branch
          %128 = sbr.rel (%p126) target = $region28
        $region27: #{tpu_custom_call.1} parent=23 // pred_region
          %129 = dma.done %s122, 128
        $region28: #{tpu_custom_call.1} parent=23 // pred_fallthru
          _
        %s130 = sand.u32 %s37, 1
        %s131 = scalar_lea.sflag [#allocation4], %s130
        %s132 = sand.u32 %s37, 1
        %s133 = smul.addr %s132, 8
        %s134 = scalar_lea.vmem [#allocation3], %s133
        %p135 = pneg %p50
        %p136 = pneg %p47
        %p137 = pneg %p76
        %p138 = pneg %p73
        %p139 = scmp.lt.s32.totalorder %s19, 1
        %s140 = scalar_select %p139, %s19, 1
        %s141 = smul.addr %s140, 8
        %s142 = scalar_lea.vmem %s1, %s141
        %p143 = scmp.lt.s32.totalorder %s19, 1
        %s144 = scalar_select %p143, %s19, 1
        %s145 = smul.addr %s144, 8
        %s146 = scalar_lea.vmem %s1, %s145
        %p147 = scmp.eq.s32.totalorder %s20, 0
        // Predicated region
        $region29: #{tpu_custom_call.1} parent=23 // pred_check
          %p148 = pneg %p147
        $region30: #{tpu_custom_call.1} parent=23 // pred_check_branch
          %150 = sbr.rel (%p148) target = $region32
        $region31: #{tpu_custom_call.1} parent=23 // pred_region
          %151 = vst [vmem:[#allocation2] sm:$0xff] 0.0
        $region32: #{tpu_custom_call.1} parent=23 // pred_fallthru
          _
        %v152 = vld [vmem:[%s125] sm:$0xff]
        %v153 = vld [vmem:[#allocation2] sm:$0xff]
        %v154 = vadd.f32 %v153, %v152
        %155 = vst [vmem:[#allocation2] sm:$0xff] %v154
        // Predicated region
        $region33: #{tpu_custom_call.1} parent=23 // pred_check
          %p156 = pneg %p147
        $region34: #{tpu_custom_call.1} parent=23 // pred_check_branch
          %158 = sbr.rel (%p156) target = $region36
        $region35: #{tpu_custom_call.1} parent=23 // pred_region
          %v159 = vld [vmem:[#allocation2] sm:$0xff]
          %160 = vadd.xlane.f32.xlu0 %v159
          %v161 = vpop.xlane.xlu0 %160
          %v162 = vmul.f32 %v161, 0.00390625
          %vm163 = vcmask 7168
          %164 = vst.msk [vmem:[%s146] sm:$0xff] %vm163, %v162
        $region36: #{tpu_custom_call.1} parent=23 // pred_fallthru
          _
        %p165 = scmp.lt.s32.totalorder %s19, 1
        %s166 = scalar_select %p165, %s19, 1
        %s167 = smul.addr %s166, 8
        %s168 = scalar_lea.vmem %s1, %s167
        // Predicated region
        $region37: #{tpu_custom_call.1} parent=23 // pred_check
          %p169 = pneg %p73
        $region38: #{tpu_custom_call.1} parent=23 // pred_check_branch
          %171 = sbr.rel (%p169) target = $region40
        $region39: #{tpu_custom_call.1} parent=23 // pred_region
          _
        $region40: #{tpu_custom_call.1} parent=23 // pred_fallthru
          _
      $region24: #{tpu_custom_call.1} parent=5 // pred_fallthru
        _
      %p172 = scmp.le.s32.totalorder 2, %s10
      // Predicated region
      $region41: #{tpu_custom_call.1} parent=5 // pred_check
        %p173 = pneg %p172
      $region42: #{tpu_custom_call.1} parent=5 // pred_check_branch
        %175 = sbr.rel (%p173) target = $region44
      $region43: #{tpu_custom_call.1} parent=5 // pred_region
        %s176 = ssub.s32 %s10, 2
        // Predicated region
        $region45: #{tpu_custom_call.1} parent=43 // pred_check
          %p177 = pneg %p79
        $region46: #{tpu_custom_call.1} parent=43 // pred_check_branch
          %179 = sbr.rel (%p177) target = $region48
        $region47: #{tpu_custom_call.1} parent=43 // pred_region
          %p180 = scmp.lt.s32.totalorder %s21, 1
          %s181 = scalar_select %p180, %s21, 1
          %s182 = smul.addr %s181, 8
          %s183 = scalar_lea.vmem %s1, %s182
        $region48: #{tpu_custom_call.1} parent=43 // pred_fallthru
          _
      $region44: #{tpu_custom_call.1} parent=5 // pred_fallthru
        _
    $region6: #{tpu_custom_call.1} parent=1 // loop_footer
      %s14 = sadd.s32 1, %s10
    $region7: #{tpu_custom_call.1} parent=1 // loop_footer_branch
      %9 = sbr.rel target = $region3
    $region8: #{tpu_custom_call.1} parent=1 // loop_exit
      _
    %184 = vsyncpa [#allocation4], 1
    %s185 = scalar_lea.sflag [#allocation4], 1
    %186 = vsyncpa %s185, 1

</llo_original>
